<compile_context>
chip_gen: v5e
topology: v5e:2x2
jax: 0.10.0
libtpu: 0.0.40
codegen_flags: <defaults>
</compile_context>

<pallas_src>
import functools

import jax
import jax.numpy as jnp
from jax.experimental import pallas as pl
from jax.experimental.pallas import tpu as pltpu


# ----------------------------------------------------------------------------
# Fused CoordAtt kernel (one batch element per grid step, NCHW layout)
# ----------------------------------------------------------------------------
def coord_att_kernel(x_ref, w1_ref, b1_ref, wh_ref, bh_ref, ww_ref, bw_ref,
                     o_ref, *, h, inv_h, inv_w):
    # x block: (1, C, H, W) -> work on (C, H, W); W = lanes, H = sublanes.
    xv = x_ref[0]                                          # input dtype, no f32 copy

    # --- coordinate pooling (f32-accumulated, stays in vregs) ---------------
    p_h = jnp.sum(xv, axis=2, dtype=jnp.float32) * inv_w   # (C, H)  mean over W
    p_w = jnp.sum(xv, axis=1, dtype=jnp.float32) * inv_h   # (C, W)  mean over H

    # --- fused "squeeze": one 1x1 conv (BN folded) over the (C, H+W) strip --
    p_cat = jnp.concatenate([p_h, p_w], axis=1)            # (C, H+W)   tiny
    y = jnp.dot(w1_ref[...], p_cat,
                preferred_element_type=jnp.float32) + b1_ref[...]  # (mip, H+W)
    y = y * (jnp.clip(y + 3.0, 0.0, 6.0) * (1.0 / 6.0))    # h_swish

    y_h = y[:, :h]                                         # (mip, H)
    y_w = y[:, h:]                                         # (mip, W)

    a_h = jax.nn.sigmoid(
        jnp.dot(wh_ref[...], y_h, preferred_element_type=jnp.float32)
        + bh_ref[...])                                     # (C, H)
    a_w = jax.nn.sigmoid(
        jnp.dot(ww_ref[...], y_w, preferred_element_type=jnp.float32)
        + bw_ref[...])                                     # (C, W)

    # --- apply attention in the input dtype; only tiny a_h/a_w are cast -----
    a_h = a_h.astype(xv.dtype)
    a_w = a_w.astype(xv.dtype)
    # out = identity * a_w * a_h   (same multiply order as the PyTorch module)
    o_ref[0] = xv * a_w[:, None, :] * a_h[:, :, None]


# ----------------------------------------------------------------------------
# Parameter construction (deterministic, synthetic) + BN folding
# ----------------------------------------------------------------------------
def init_coordatt_params(key, inp, oup, reduction=32, eps=1e-5):
    mip = max(8, inp // reduction)
    ks = jax.random.split(key, 10)

    conv1_w = jax.random.normal(ks[0], (mip, inp), jnp.float32) * 0.3   # (mip, inp)
    conv1_b = 0.1 * jax.random.normal(ks[1], (mip,), jnp.float32)
    bn_gamma = 1.0 + 0.1 * jax.random.normal(ks[2], (mip,), jnp.float32)
    bn_beta = 0.1 * jax.random.normal(ks[3], (mip,), jnp.float32)
    bn_mean = 0.1 * jax.random.normal(ks[4], (mip,), jnp.float32)
    bn_var = jnp.abs(jax.random.normal(ks[5], (mip,), jnp.float32)) + 0.5
    convh_w = jax.random.normal(ks[6], (oup, mip), jnp.float32) * 0.3   # (oup, mip)
    convh_b = 0.1 * jax.random.normal(ks[7], (oup,), jnp.float32)
    convw_w = jax.random.normal(ks[8], (oup, mip), jnp.float32) * 0.3
    convw_b = 0.1 * jax.random.normal(ks[9], (oup,), jnp.float32)

    # Fold BatchNorm (eval mode) into conv1:  y = (W1 @ p + b) * s + t
    s = bn_gamma / jnp.sqrt(bn_var + eps)
    t = bn_beta - bn_mean * s
    w1_folded = conv1_w * s[:, None]                                    # (mip, inp)
    b1_folded = (conv1_b * s + t).reshape(mip, 1)

    return dict(
        # kernel-ready (channel-major matmul layout: out = W @ p)
        w1=w1_folded, b1=b1_folded,
        wh=convh_w, bh=convh_b.reshape(oup, 1),
        ww=convw_w, bw=convw_b.reshape(oup, 1),
        mip=mip, oup=oup,
        # raw params kept for the pure-JAX reference check
        _conv1_w=conv1_w, _conv1_b=conv1_b,
        _bn=(bn_gamma, bn_beta, bn_mean, bn_var, eps),
        _convh_w=convh_w, _convh_b=convh_b,
        _convw_w=convw_w, _convw_b=convw_b,
    )


# ----------------------------------------------------------------------------
# Wrapper: NCHW in, NCHW out — no layout glue around the kernel
# ----------------------------------------------------------------------------
def coord_att_forward(x_nchw, p):
    N, C, H, W = x_nchw.shape
    mip, oup = p["mip"], p["oup"]
    assert oup == C, "CoordAtt residual multiply requires oup == inp"

    kern = functools.partial(coord_att_kernel, h=H, inv_h=1.0 / H, inv_w=1.0 / W)

    def const_spec(shape):                           # weights stay VMEM-resident
        return pl.BlockSpec(shape, lambda n, _s=shape: (0,) * len(_s))

    itemsize = jnp.dtype(x_nchw.dtype).itemsize
    block_bytes = C * H * W * itemsize
    # double-buffered in + out + weights + headroom; 32 MiB floor matches the
    # default scoped limit on v6e/v7x and raises v5e's 16 MiB default.
    vmem_limit = int(min(96 * 1024 * 1024,
                         max(32 * 1024 * 1024, 6 * block_bytes + 4 * 1024 * 1024)))

    cost = pl.CostEstimate(
        flops=int(N * (2 * (H + W) * C * mip      # conv1
                       + 2 * (H + W) * mip * C    # conv_h + conv_w
                       + 3 * H * W * C)),         # pooling sums + apply
        transcendentals=int(N * (H + W) * C),     # sigmoids
        bytes_accessed=int(2 * N * block_bytes
                           + (C * mip + 2 * mip * C + 3 * mip) * 4),
    )

    return pl.pallas_call(
        kern,
        out_shape=jax.ShapeDtypeStruct((N, C, H, W), x_nchw.dtype),
        grid=(N,),
        in_specs=[
            pl.BlockSpec((1, C, H, W), lambda n: (n, 0, 0, 0)),   # x: one image/step
            const_spec((C, mip) if False else (mip, C)),          # w1  (mip, C)
            const_spec((mip, 1)),                                 # b1
            const_spec((oup, mip)), const_spec((oup, 1)),         # wh, bh
            const_spec((oup, mip)), const_spec((oup, 1)),         # ww, bw
        ],
        out_specs=pl.BlockSpec((1, C, H, W), lambda n: (n, 0, 0, 0)),
        compiler_params=pltpu.CompilerParams(
            dimension_semantics=("parallel",),       # shards batch across TCs
            vmem_limit_bytes=vmem_limit),
        cost_estimate=cost,
    )(x_nchw, p["w1"], p["b1"], p["wh"], p["bh"], p["ww"], p["bw"])


# ----------------------------------------------------------------------------
# Pure-JAX reference (mirrors the PyTorch forward exactly, unfolded params)
# ----------------------------------------------------------------------------
def coord_att_reference(x_nchw, p):
    n, c, h, w = x_nchw.shape
    gamma, beta, mean, var, eps = p["_bn"]

    x_h = jnp.mean(x_nchw, axis=3, keepdims=True)                    # (n,c,h,1)
    x_w = jnp.mean(x_nchw, axis=2, keepdims=True)                    # (n,c,1,w)
    x_w = jnp.transpose(x_w, (0, 1, 3, 2))                           # (n,c,w,1)
    y = jnp.concatenate([x_h, x_w], axis=2)                          # (n,c,h+w,1)

    y = (jnp.einsum("ncsx,mc->nmsx", y, p["_conv1_w"])
         + p["_conv1_b"][None, :, None, None])
    s = gamma / jnp.sqrt(var + eps)
    y = (y - mean[None, :, None, None]) * s[None, :, None, None] \
        + beta[None, :, None, None]
    y = y * jnp.clip(y + 3.0, 0.0, 6.0) / 6.0                        # h_swish

    y_h, y_w = y[:, :, :h, :], y[:, :, h:, :]
    y_w = jnp.transpose(y_w, (0, 1, 3, 2))                           # (n,mip,1,w)
    a_h = jax.nn.sigmoid(jnp.einsum("nmsx,om->nosx", y_h, p["_convh_w"])
                         + p["_convh_b"][None, :, None, None])       # (n,oup,h,1)
    a_w = jax.nn.sigmoid(jnp.einsum("nmxs,om->noxs", y_w, p["_convw_w"])
                         + p["_convw_b"][None, :, None, None])       # (n,oup,1,w)
    return x_nchw * a_w * a_h


if __name__ == "__main__":
    key = jax.random.PRNGKey(0)
    kx, kp = jax.random.split(key)

    N, C, H, W = 2, 4, 16, 16
    x = jax.random.normal(kx, (N, C, H, W), jnp.float32)

    params = init_coordatt_params(kp, inp=C, oup=C, reduction=32)

    # f32 correctness check
    out = jax.block_until_ready(coord_att_forward(x, params))
    ref = jax.block_until_ready(coord_att_reference(x, params))
    assert out.shape == (N, C, H, W)
    assert jnp.allclose(out, ref, atol=1e-4, rtol=1e-4), "f32 mismatch vs reference"

    # bf16 smoke test (exercises the no-f32-materialize pooling / apply path)
    x_bf16 = x.astype(jnp.bfloat16)
    out_bf16 = jax.block_until_ready(coord_att_forward(x_bf16, params))
    ref_bf16 = coord_att_reference(x_bf16.astype(jnp.float32), params)
    assert out_bf16.dtype == jnp.bfloat16
    assert jnp.allclose(out_bf16.astype(jnp.float32), ref_bf16,
                        atol=5e-2, rtol=5e-2), "bf16 mismatch vs reference"

    print("KERNEL_OK")
</pallas_src>

<mosaic_0001>
module attributes {stable_mosaic.version = 11 : i64} {
  func.func @coord_att_kernel(%arg0: i32, %arg1: memref<1x4x16x16xf32, #tpu.memory_space<vmem>>, %arg2: memref<8x4xf32, #tpu.memory_space<vmem>>, %arg3: memref<8x1xf32, #tpu.memory_space<vmem>>, %arg4: memref<4x8xf32, #tpu.memory_space<vmem>>, %arg5: memref<4x1xf32, #tpu.memory_space<vmem>>, %arg6: memref<4x8xf32, #tpu.memory_space<vmem>>, %arg7: memref<4x1xf32, #tpu.memory_space<vmem>>, %arg8: memref<1x4x16x16xf32, #tpu.memory_space<vmem>>) attributes {dimension_semantics = [#tpu.dimension_semantics<parallel>], iteration_bounds = array<i64: 2>, scalar_prefetch = 0 : i64, scratch_operands = 0 : i64, tpu.core_type = #tpu.core_type<tc>, window_params = [{transform_indices = @transform_0, window_bounds = array<i64: 1, 4, 16, 16>}, {pipeline_mode = #tpu.pipeline_mode<synchronous>, transform_indices = @transform_1, window_bounds = array<i64: 8, 4>}, {pipeline_mode = #tpu.pipeline_mode<synchronous>, transform_indices = @transform_2, window_bounds = array<i64: 8, 1>}, {pipeline_mode = #tpu.pipeline_mode<synchronous>, transform_indices = @transform_3, window_bounds = array<i64: 4, 8>}, {pipeline_mode = #tpu.pipeline_mode<synchronous>, transform_indices = @transform_4, window_bounds = array<i64: 4, 1>}, {pipeline_mode = #tpu.pipeline_mode<synchronous>, transform_indices = @transform_5, window_bounds = array<i64: 4, 8>}, {pipeline_mode = #tpu.pipeline_mode<synchronous>, transform_indices = @transform_6, window_bounds = array<i64: 4, 1>}, {transform_indices = @transform_7, window_bounds = array<i64: 1, 4, 16, 16>}]} {
    %c0 = arith.constant 0 : index
    %c0_0 = arith.constant 0 : index
    %c0_1 = arith.constant 0 : index
    %c0_2 = arith.constant 0 : index
    %0 = vector.load %arg1[%c0, %c0_0, %c0_1, %c0_2] : memref<1x4x16x16xf32, #tpu.memory_space<vmem>>, vector<1x4x16x16xf32>
    %1 = vector.shape_cast %0 : vector<1x4x16x16xf32> to vector<4x16x16xf32>
    %cst = arith.constant dense<0.000000e+00> : vector<4x16xf32>
    %2 = vector.multi_reduction <add>, %1, %cst [2] : vector<4x16x16xf32> to vector<4x16xf32>
    %cst_3 = arith.constant 6.250000e-02 : f32
    %3 = vector.broadcast %cst_3 : f32 to vector<4x16xf32>
    %4 = arith.mulf %2, %3 : vector<4x16xf32>
    %cst_4 = arith.constant dense<0.000000e+00> : vector<4x16xf32>
    %5 = vector.multi_reduction <add>, %1, %cst_4 [1] : vector<4x16x16xf32> to vector<4x16xf32>
    %cst_5 = arith.constant 6.250000e-02 : f32
    %6 = vector.broadcast %cst_5 : f32 to vector<4x16xf32>
    %7 = arith.mulf %5, %6 : vector<4x16xf32>
    %8 = tpu.concatenate %4, %7 in 1 : vector<4x16xf32>, vector<4x16xf32> -> vector<4x32xf32>
    %c0_6 = arith.constant 0 : index
    %c0_7 = arith.constant 0 : index
    %9 = vector.load %arg2[%c0_6, %c0_7] : memref<8x4xf32, #tpu.memory_space<vmem>>, vector<8x4xf32>
    %cst_8 = arith.constant dense<0.000000e+00> : vector<8x32xf32>
    %10 = tpu.matmul %9, %8, %cst_8 {dimension_numbers = #tpu.dot_dimension_numbers<[1], [0], [0], [1], [0, 0, 1, 1], [], []>} : vector<8x4xf32>, vector<4x32xf32>, vector<8x32xf32> -> vector<8x32xf32>
    %c0_9 = arith.constant 0 : index
    %c0_10 = arith.constant 0 : index
    %11 = vector.load %arg3[%c0_9, %c0_10] : memref<8x1xf32, #tpu.memory_space<vmem>>, vector<8x1xf32>
    %12 = vector.broadcast %11 : vector<8x1xf32> to vector<8x32xf32>
    %13 = arith.addf %10, %12 : vector<8x32xf32>
    %cst_11 = arith.constant 3.000000e+00 : f32
    %14 = vector.broadcast %cst_11 : f32 to vector<8x32xf32>
    %15 = arith.addf %13, %14 : vector<8x32xf32>
    %cst_12 = arith.constant 0.000000e+00 : f32
    %cst_13 = arith.constant 6.000000e+00 : f32
    %16 = vector.broadcast %cst_12 : f32 to vector<8x32xf32>
    %17 = arith.maximumf %16, %15 : vector<8x32xf32>
    %18 = vector.broadcast %cst_13 : f32 to vector<8x32xf32>
    %19 = arith.minimumf %18, %17 : vector<8x32xf32>
    %cst_14 = arith.constant 0.166666672 : f32
    %20 = vector.broadcast %cst_14 : f32 to vector<8x32xf32>
    %21 = arith.mulf %19, %20 : vector<8x32xf32>
    %22 = arith.mulf %13, %21 : vector<8x32xf32>
    %23 = vector.extract_strided_slice %22 {offsets = [0, 0], sizes = [8, 16], strides = [1, 1]} : vector<8x32xf32> to vector<8x16xf32>
    %24 = vector.extract_strided_slice %22 {offsets = [0, 16], sizes = [8, 16], strides = [1, 1]} : vector<8x32xf32> to vector<8x16xf32>
    %c0_15 = arith.constant 0 : index
    %c0_16 = arith.constant 0 : index
    %25 = vector.load %arg4[%c0_15, %c0_16] : memref<4x8xf32, #tpu.memory_space<vmem>>, vector<4x8xf32>
    %cst_17 = arith.constant dense<0.000000e+00> : vector<4x16xf32>
    %26 = tpu.matmul %25, %23, %cst_17 {dimension_numbers = #tpu.dot_dimension_numbers<[1], [0], [0], [1], [0, 0, 1, 1], [], []>} : vector<4x8xf32>, vector<8x16xf32>, vector<4x16xf32> -> vector<4x16xf32>
    %c0_18 = arith.constant 0 : index
    %c0_19 = arith.constant 0 : index
    %27 = vector.load %arg5[%c0_18, %c0_19] : memref<4x1xf32, #tpu.memory_space<vmem>>, vector<4x1xf32>
    %28 = vector.broadcast %27 : vector<4x1xf32> to vector<4x16xf32>
    %29 = arith.addf %26, %28 : vector<4x16xf32>
    %30 = arith.negf %29 : vector<4x16xf32>
    %31 = math.exp %30 : vector<4x16xf32>
    %cst_20 = arith.constant 1.000000e+00 : f32
    %32 = vector.broadcast %cst_20 : f32 to vector<4x16xf32>
    %33 = arith.addf %32, %31 : vector<4x16xf32>
    %34 = arith.divf %32, %33 : vector<4x16xf32>
    %c0_21 = arith.constant 0 : index
    %c0_22 = arith.constant 0 : index
    %35 = vector.load %arg6[%c0_21, %c0_22] : memref<4x8xf32, #tpu.memory_space<vmem>>, vector<4x8xf32>
    %cst_23 = arith.constant dense<0.000000e+00> : vector<4x16xf32>
    %36 = tpu.matmul %35, %24, %cst_23 {dimension_numbers = #tpu.dot_dimension_numbers<[1], [0], [0], [1], [0, 0, 1, 1], [], []>} : vector<4x8xf32>, vector<8x16xf32>, vector<4x16xf32> -> vector<4x16xf32>
    %c0_24 = arith.constant 0 : index
    %c0_25 = arith.constant 0 : index
    %37 = vector.load %arg7[%c0_24, %c0_25] : memref<4x1xf32, #tpu.memory_space<vmem>>, vector<4x1xf32>
    %38 = vector.broadcast %37 : vector<4x1xf32> to vector<4x16xf32>
    %39 = arith.addf %36, %38 : vector<4x16xf32>
    %40 = arith.negf %39 : vector<4x16xf32>
    %41 = math.exp %40 : vector<4x16xf32>
    %cst_26 = arith.constant 1.000000e+00 : f32
    %42 = vector.broadcast %cst_26 : f32 to vector<4x16xf32>
    %43 = arith.addf %42, %41 : vector<4x16xf32>
    %44 = arith.divf %42, %43 : vector<4x16xf32>
    %45 = vector.shape_cast %44 : vector<4x16xf32> to vector<4x1x16xf32>
    %46 = vector.broadcast %45 : vector<4x1x16xf32> to vector<4x16x16xf32>
    %47 = arith.mulf %1, %46 : vector<4x16x16xf32>
    %48 = vector.shape_cast %34 : vector<4x16xf32> to vector<4x16x1xf32>
    %49 = vector.broadcast %48 : vector<4x16x1xf32> to vector<4x16x16xf32>
    %50 = arith.mulf %47, %49 : vector<4x16x16xf32>
    %c0_27 = arith.constant 0 : index
    %c0_28 = arith.constant 0 : index
    %c0_29 = arith.constant 0 : index
    %c0_30 = arith.constant 0 : index
    %51 = vector.load %arg8[%c0_27, %c0_28, %c0_29, %c0_30] : memref<1x4x16x16xf32, #tpu.memory_space<vmem>>, vector<1x4x16x16xf32>
    %52 = vector.shape_cast %51 : vector<1x4x16x16xf32> to vector<4x16x16xf32>
    %53 = vector.shape_cast %50 : vector<4x16x16xf32> to vector<1x4x16x16xf32>
    tpu.vector_store %arg8[%c0_27, %c0_28, %c0_29, %c0_30], %53 {strides = array<i32>} : memref<1x4x16x16xf32, #tpu.memory_space<vmem>>, vector<1x4x16x16xf32>,
    return
  }
  func.func @transform_0(%arg0: i32) -> (i32, i32, i32, i32) {
    %c0_i32 = arith.constant 0 : i32
    %c0_i32_0 = arith.constant 0 : i32
    %c0_i32_1 = arith.constant 0 : i32
    %c0_i32_2 = arith.constant 0 : i32
    return %arg0, %c0_i32, %c0_i32_0, %c0_i32_1 : i32, i32, i32, i32
  }
  func.func @transform_1(%arg0: i32) -> (i32, i32) {
    %c0_i32 = arith.constant 0 : i32
    %c0_i32_0 = arith.constant 0 : i32
    %c0_i32_1 = arith.constant 0 : i32
    return %c0_i32, %c0_i32_0 : i32, i32
  }
  func.func @transform_2(%arg0: i32) -> (i32, i32) {
    %c0_i32 = arith.constant 0 : i32
    %c0_i32_0 = arith.constant 0 : i32
    %c0_i32_1 = arith.constant 0 : i32
    return %c0_i32, %c0_i32_0 : i32, i32
  }
  func.func @transform_3(%arg0: i32) -> (i32, i32) {
    %c0_i32 = arith.constant 0 : i32
    %c0_i32_0 = arith.constant 0 : i32
    %c0_i32_1 = arith.constant 0 : i32
    return %c0_i32, %c0_i32_0 : i32, i32
  }
  func.func @transform_4(%arg0: i32) -> (i32, i32) {
    %c0_i32 = arith.constant 0 : i32
    %c0_i32_0 = arith.constant 0 : i32
    %c0_i32_1 = arith.constant 0 : i32
    return %c0_i32, %c0_i32_0 : i32, i32
  }
  func.func @transform_5(%arg0: i32) -> (i32, i32) {
    %c0_i32 = arith.constant 0 : i32
    %c0_i32_0 = arith.constant 0 : i32
    %c0_i32_1 = arith.constant 0 : i32
    return %c0_i32, %c0_i32_0 : i32, i32
  }
  func.func @transform_6(%arg0: i32) -> (i32, i32) {
    %c0_i32 = arith.constant 0 : i32
    %c0_i32_0 = arith.constant 0 : i32
    %c0_i32_1 = arith.constant 0 : i32
    return %c0_i32, %c0_i32_0 : i32, i32
  }
  func.func @transform_7(%arg0: i32) -> (i32, i32, i32, i32) {
    %c0_i32 = arith.constant 0 : i32
    %c0_i32_0 = arith.constant 0 : i32
    %c0_i32_1 = arith.constant 0 : i32
    %c0_i32_2 = arith.constant 0 : i32
    return %arg0, %c0_i32, %c0_i32_0, %c0_i32_1 : i32, i32, i32, i32
  }
}

</mosaic_0001>

<llo_original>
// kernel: tpu_custom_call.1
$region0: #{tpu_custom_call.1}
  #allocation0 [shape = 'u32[]', space=smem, size = 0x4, offset = 0x4, fixed_abs, tag = 'smem constant byte address 0x4 - core index']
  #allocation1 [shape = 'u32[72,128]{1,0:T(1,128)}', space=vmem, size = 0x9000, scoped, tag = 'internal scratch']
  %s0 = inlined_call_operand.hbm [shape: f32[2,4,16,16], index: 0, kind: input, shape index: {}]
  %s1 = inlined_call_operand.vmem [shape: f32[8,4], index: 1, kind: input, shape index: {}]
  %s2 = inlined_call_operand.vmem [shape: f32[8,1], index: 2, kind: input, shape index: {}]
  %s3 = inlined_call_operand.vmem [shape: f32[4,8], index: 3, kind: input, shape index: {}]
  %s4 = inlined_call_operand.vmem [shape: f32[4,1], index: 4, kind: input, shape index: {}]
  %s5 = inlined_call_operand.vmem [shape: f32[4,8], index: 5, kind: input, shape index: {}]
  %s6 = inlined_call_operand.vmem [shape: f32[4,1], index: 6, kind: input, shape index: {}]
  %s7 = inlined_call_operand.hbm [shape: f32[2,4,16,16], index: 7, kind: output, shape index: {}]
  %s8 = sld [smem:[#allocation0]]
  $region65: #{tpu_custom_call.1} parent=0
    _
  %s10 = ssub.s32 1, %s8
  %s11 = scalar_select 0, %s10, %s8
  $region1: #{tpu_custom_call.1} parent=0
    #allocation2 [shape = 'u8[65536]{0}', space=vmem, size = 0x10000, scoped, tag = 'input window, operand 0']
    #allocation3 [shape = 's32[2]{0}', space=sflag, size = 0x8, scoped, tag = 'scoped memory for tpu_custom_call.1']
    #allocation4 [shape = 's32[2]{0}', space=sflag, size = 0x8, scoped, tag = 'scoped memory for tpu_custom_call.1']
    #allocation5 [shape = 'u8[65536]{0}', space=vmem, size = 0x10000, scoped, tag = 'output window, operand 0']
    %12 = vsyncpa [#allocation3], 0
    %s13 = scalar_lea.sflag [#allocation3], 1
    %14 = vsyncpa %s13, 0
    %15 = vsyncpa [#allocation4], 0
    %s16 = scalar_lea.sflag [#allocation4], 1
    %17 = vsyncpa %s16, 0
    loop: start=0, step=1, limit=4
    $region2: #{tpu_custom_call.1} parent=1 // loop_pre_header
      _
    $region3: #{tpu_custom_call.1} parent=1 // loop_header
      %s19 = sphi 0, %s23
      %p20 = scmp.ge.s32.totalorder %s19, 4
      %s29 = sphi 0, %s31
      %s32 = sphi 0, %s29
      %s33 = sphi 0, %s32
      %s49 = sphi 0, %s33
      %s53 = sphi 0, %s53
      %s55 = sphi 0, %s53
      %s56 = sphi 0, %s55
      %s70 = sphi 0, %s56
      %s74 = sphi 0, %s74
      %s76 = sphi 0, %s74
      %s77 = sphi 0, %s76
      %s91 = sphi 0, %s77
      %s95 = sphi 0, %s95
      %s97 = sphi 0, %s95
      %s98 = sphi 0, %s97
      %s112 = sphi 0, %s98
      %s116 = sphi 0, %s116
      %s118 = sphi 0, %s116
      %s119 = sphi 0, %s118
      %s133 = sphi 0, %s119
      %s137 = sphi 0, %s137
      %s139 = sphi 0, %s137
      %s140 = sphi 0, %s139
      %s154 = sphi 0, %s140
      %s158 = sphi 0, %s158
      %s160 = sphi 0, %s158
      %s161 = sphi 0, %s160
      %s175 = sphi 0, %s161
      %s181 = sphi 0, %s183
      %s184 = sphi 0, %s181
      %s185 = sphi 0, %s184
      %s201 = sphi 0, %s185
    $region4: #{tpu_custom_call.1} parent=1 // loop_header_branch
      %22 = sbr.rel (%p20) target = $region8
    $region5: #{tpu_custom_call.1} parent=1 // loop_body
      %s24 = ssub.s32 %s19, 1
      %s25 = ssub.s32 %s19, 2
      %s26 = sadd.s32 %s19, 1
      %s27 = ssub.s32 %s19, %s26
      %p28 = scmp.eq.s32.totalorder %s27, 0
      %s30 = sadd.s32 %s29, 1
      %s31 = scalar_select %p28, %s29, %s30
      %p34 = pneg %p28
      %p35 = scmp.eq.s32.totalorder %s19, 1
      %p36 = por %p34, %p35
      %p37 = scmp.ne.s32.totalorder %s29, %s32
      %p38 = scmp.eq.s32.totalorder %s19, 0
      %p39 = por %p37, %p38
      %p40 = scmp.ne.s32.totalorder %s29, %s32
      %p41 = scmp.eq.s32.totalorder %s24, 1
      %p42 = por %p40, %p41
      %p43 = scmp.ne.s32.totalorder %s32, %s33
      %p44 = scmp.eq.s32.totalorder %s24, 0
      %p45 = por %p43, %p44
      %p46 = scmp.ne.s32.totalorder %s32, %s33
      %p47 = scmp.eq.s32.totalorder %s25, 1
      %p48 = por %p46, %p47
      %p50 = scmp.ne.s32.totalorder %s33, %s49
      %p51 = scmp.eq.s32.totalorder %s25, 0
      %p52 = por %p50, %p51
      %s54 = sadd.s32 %s53, 1
      %p57 = scmp.eq.s32.totalorder %s19, 1
      %p58 = scmp.ne.s32.totalorder %s53, %s55
      %p59 = scmp.eq.s32.totalorder %s19, 0
      %p60 = por %p58, %p59
      %p61 = scmp.ne.s32.totalorder %s53, %s55
      %p62 = scmp.eq.s32.totalorder %s24, 1
      %p63 = por %p61, %p62
      %p64 = scmp.ne.s32.totalorder %s55, %s56
      %p65 = scmp.eq.s32.totalorder %s24, 0
      %p66 = por %p64, %p65
      %p67 = scmp.ne.s32.totalorder %s55, %s56
      %p68 = scmp.eq.s32.totalorder %s25, 1
      %p69 = por %p67, %p68
      %p71 = scmp.ne.s32.totalorder %s56, %s70
      %p72 = scmp.eq.s32.totalorder %s25, 0
      %p73 = por %p71, %p72
      %s75 = sadd.s32 %s74, 1
      %p78 = scmp.eq.s32.totalorder %s19, 1
      %p79 = scmp.ne.s32.totalorder %s74, %s76
      %p80 = scmp.eq.s32.totalorder %s19, 0
      %p81 = por %p79, %p80
      %p82 = scmp.ne.s32.totalorder %s74, %s76
      %p83 = scmp.eq.s32.totalorder %s24, 1
      %p84 = por %p82, %p83
      %p85 = scmp.ne.s32.totalorder %s76, %s77
      %p86 = scmp.eq.s32.totalorder %s24, 0
      %p87 = por %p85, %p86
      %p88 = scmp.ne.s32.totalorder %s76, %s77
      %p89 = scmp.eq.s32.totalorder %s25, 1
      %p90 = por %p88, %p89
      %p92 = scmp.ne.s32.totalorder %s77, %s91
      %p93 = scmp.eq.s32.totalorder %s25, 0
      %p94 = por %p92, %p93
      %s96 = sadd.s32 %s95, 1
      %p99 = scmp.eq.s32.totalorder %s19, 1
      %p100 = scmp.ne.s32.totalorder %s95, %s97
      %p101 = scmp.eq.s32.totalorder %s19, 0
      %p102 = por %p100, %p101
      %p103 = scmp.ne.s32.totalorder %s95, %s97
      %p104 = scmp.eq.s32.totalorder %s24, 1
      %p105 = por %p103, %p104
      %p106 = scmp.ne.s32.totalorder %s97, %s98
      %p107 = scmp.eq.s32.totalorder %s24, 0
      %p108 = por %p106, %p107
      %p109 = scmp.ne.s32.totalorder %s97, %s98
      %p110 = scmp.eq.s32.totalorder %s25, 1
      %p111 = por %p109, %p110
      %p113 = scmp.ne.s32.totalorder %s98, %s112
      %p114 = scmp.eq.s32.totalorder %s25, 0
      %p115 = por %p113, %p114
      %s117 = sadd.s32 %s116, 1
      %p120 = scmp.eq.s32.totalorder %s19, 1
      %p121 = scmp.ne.s32.totalorder %s116, %s118
      %p122 = scmp.eq.s32.totalorder %s19, 0
      %p123 = por %p121, %p122
      %p124 = scmp.ne.s32.totalorder %s116, %s118
      %p125 = scmp.eq.s32.totalorder %s24, 1
      %p126 = por %p124, %p125
      %p127 = scmp.ne.s32.totalorder %s118, %s119
      %p128 = scmp.eq.s32.totalorder %s24, 0
      %p129 = por %p127, %p128
      %p130 = scmp.ne.s32.totalorder %s118, %s119
      %p131 = scmp.eq.s32.totalorder %s25, 1
      %p132 = por %p130, %p131
      %p134 = scmp.ne.s32.totalorder %s119, %s133
      %p135 = scmp.eq.s32.totalorder %s25, 0
      %p136 = por %p134, %p135
      %s138 = sadd.s32 %s137, 1
      %p141 = scmp.eq.s32.totalorder %s19, 1
      %p142 = scmp.ne.s32.totalorder %s137, %s139
      %p143 = scmp.eq.s32.totalorder %s19, 0
      %p144 = por %p142, %p143
      %p145 = scmp.ne.s32.totalorder %s137, %s139
      %p146 = scmp.eq.s32.totalorder %s24, 1
      %p147 = por %p145, %p146
      %p148 = scmp.ne.s32.totalorder %s139, %s140
      %p149 = scmp.eq.s32.totalorder %s24, 0
      %p150 = por %p148, %p149
      %p151 = scmp.ne.s32.totalorder %s139, %s140
      %p152 = scmp.eq.s32.totalorder %s25, 1
      %p153 = por %p151, %p152
      %p155 = scmp.ne.s32.totalorder %s140, %s154
      %p156 = scmp.eq.s32.totalorder %s25, 0
      %p157 = por %p155, %p156
      %s159 = sadd.s32 %s158, 1
      %p162 = scmp.eq.s32.totalorder %s19, 1
      %p163 = scmp.ne.s32.totalorder %s158, %s160
      %p164 = scmp.eq.s32.totalorder %s19, 0
      %p165 = por %p163, %p164
      %p166 = scmp.ne.s32.totalorder %s158, %s160
      %p167 = scmp.eq.s32.totalorder %s24, 1
      %p168 = por %p166, %p167
      %p169 = scmp.ne.s32.totalorder %s160, %s161
      %p170 = scmp.eq.s32.totalorder %s24, 0
      %p171 = por %p169, %p170
      %p172 = scmp.ne.s32.totalorder %s160, %s161
      %p173 = scmp.eq.s32.totalorder %s25, 1
      %p174 = por %p172, %p173
      %p176 = scmp.ne.s32.totalorder %s161, %s175
      %p177 = scmp.eq.s32.totalorder %s25, 0
      %p178 = por %p176, %p177
      %s179 = ssub.s32 %s19, %s26
      %p180 = scmp.eq.s32.totalorder %s179, 0
      %s182 = sadd.s32 %s181, 1
      %s183 = scalar_select %p180, %s181, %s182
      %p186 = pneg %p180
      %p187 = scmp.eq.s32.totalorder %s19, 1
      %p188 = por %p186, %p187
      %p189 = scmp.ne.s32.totalorder %s181, %s184
      %p190 = scmp.eq.s32.totalorder %s19, 0
      %p191 = por %p189, %p190
      %p192 = scmp.ne.s32.totalorder %s181, %s184
      %p193 = scmp.eq.s32.totalorder %s24, 1
      %p194 = por %p192, %p193
      %p195 = scmp.ne.s32.totalorder %s184, %s185
      %p196 = scmp.eq.s32.totalorder %s24, 0
      %p197 = por %p195, %p196
      %p198 = scmp.ne.s32.totalorder %s184, %s185
      %p199 = scmp.eq.s32.totalorder %s25, 1
      %p200 = por %p198, %p199
      %p202 = scmp.ne.s32.totalorder %s185, %s201
      %p203 = scmp.eq.s32.totalorder %s25, 0
      %p204 = por %p202, %p203
      %p205 = scmp.le.s32.totalorder 1, %s19
      %p206 = scmp.lt.s32.totalorder %s19, 3
      %p207 = pnand %p205, %p206
      %p208 = pneg %p207
      // Predicated region
      $region9: #{tpu_custom_call.1} parent=5 // pred_check
        _
      $region10: #{tpu_custom_call.1} parent=5 // pred_check_branch
        %210 = sbr.rel (%p207) target = $region12
      $region11: #{tpu_custom_call.1} parent=5 // pred_region
        %s211 = ssub.s32 %s19, 1
        // Predicated region
        $region13: #{tpu_custom_call.1} parent=11 // pred_check
          %p212 = pneg %p66
        $region14: #{tpu_custom_call.1} parent=11 // pred_check_branch
          %214 = sbr.rel (%p212) target = $region16
        $region15: #{tpu_custom_call.1} parent=11 // pred_region
          _
        $region16: #{tpu_custom_call.1} parent=11 // pred_fallthru
          _
        // Predicated region
        $region17: #{tpu_custom_call.1} parent=11 // pred_check
          %p215 = pneg %p87
        $region18: #{tpu_custom_call.1} parent=11 // pred_check_branch
          %217 = sbr.rel (%p215) target = $region20
        $region19: #{tpu_custom_call.1} parent=11 // pred_region
          _
        $region20: #{tpu_custom_call.1} parent=11 // pred_fallthru
          _
        // Predicated region
        $region21: #{tpu_custom_call.1} parent=11 // pred_check
          %p218 = pneg %p108
        $region22: #{tpu_custom_call.1} parent=11 // pred_check_branch
          %220 = sbr.rel (%p218) target = $region24
        $region23: #{tpu_custom_call.1} parent=11 // pred_region
          _
        $region24: #{tpu_custom_call.1} parent=11 // pred_fallthru
          _
        // Predicated region
        $region25: #{tpu_custom_call.1} parent=11 // pred_check
          %p221 = pneg %p129
        $region26: #{tpu_custom_call.1} parent=11 // pred_check_branch
          %223 = sbr.rel (%p221) target = $region28
        $region27: #{tpu_custom_call.1} parent=11 // pred_region
          _
        $region28: #{tpu_custom_call.1} parent=11 // pred_fallthru
          _
        // Predicated region
        $region29: #{tpu_custom_call.1} parent=11 // pred_check
          %p224 = pneg %p150
        $region30: #{tpu_custom_call.1} parent=11 // pred_check_branch
          %226 = sbr.rel (%p224) target = $region32
        $region31: #{tpu_custom_call.1} parent=11 // pred_region
          _
        $region32: #{tpu_custom_call.1} parent=11 // pred_fallthru
          _
        // Predicated region
        $region33: #{tpu_custom_call.1} parent=11 // pred_check
          %p227 = pneg %p171
        $region34: #{tpu_custom_call.1} parent=11 // pred_check_branch
          %229 = sbr.rel (%p227) target = $region36
        $region35: #{tpu_custom_call.1} parent=11 // pred_region
          _
        $region36: #{tpu_custom_call.1} parent=11 // pred_fallthru
          _
      $region12: #{tpu_custom_call.1} parent=5 // pred_fallthru
        _
      %p230 = scmp.lt.s32.totalorder %s19, 2
      // Predicated region
      $region37: #{tpu_custom_call.1} parent=5 // pred_check
        %p231 = pneg %p230
      $region38: #{tpu_custom_call.1} parent=5 // pred_check_branch
        %233 = sbr.rel (%p231) target = $region40
      $region39: #{tpu_custom_call.1} parent=5 // pred_region
        // Predicated region
        $region41: #{tpu_custom_call.1} parent=39 // pred_check
          %p234 = pneg %p39
        $region42: #{tpu_custom_call.1} parent=39 // pred_check_branch
          %236 = sbr.rel (%p234) target = $region44
        $region43: #{tpu_custom_call.1} parent=39 // pred_region
          %s237 = sand.u32 %s29, 1
          %s238 = scalar_lea.sflag [#allocation3], %s237
          %s239 = sand.u32 %s29, 1
          %s240 = smul.addr %s239, 64
          %s241 = scalar_lea.vmem [#allocation2], %s240
          %243 = vsyncadd %s238, 0
          %s244 = smul.addr %s19, 8
          %s245 = smul.addr %s244, 8
          %s246 = scalar_lea.hbm %s0, %s245
          %s247 = sshll.u32 %s246, 4
          %s248 = int_to_ptr.hbm [resolvable:$true] %s247
          %s249 = sshll.u32 %s241, 4
          %s250 = int_to_ptr.vmem [resolvable:$true] %s249
          %255 = dma.hbm_to_vmem [thread:$0]  %s248, 1024, %s250, %s238, 128, 128, 8
        $region44: #{tpu_custom_call.1} parent=39 // pred_fallthru
          _
      $region40: #{tpu_custom_call.1} parent=5 // pred_fallthru
        _
      %p256 = scmp.le.s32.totalorder 1, %s19
      %p257 = scmp.lt.s32.totalorder %s19, 3
      %p258 = pnand %p256, %p257
      %p259 = pneg %p258
      // Predicated region
      $region45: #{tpu_custom_call.1} parent=5 // pred_check
        _
      $region46: #{tpu_custom_call.1} parent=5 // pred_check_branch
        %261 = sbr.rel (%p258) target = $region48
      $region47: #{tpu_custom_call.1} parent=5 // pred_region
        %s262 = ssub.s32 %s19, 1
        %s263 = sand.u32 %s32, 1
        %s264 = scalar_lea.sflag [#allocation3], %s263
        %s265 = sand.u32 %s32, 1
        %s266 = smul.addr %s265, 64
        %s267 = scalar_lea.vmem [#allocation2], %s266
        // Predicated region
        $region49: #{tpu_custom_call.1} parent=47 // pred_check
          %p268 = pneg %p45
        $region50: #{tpu_custom_call.1} parent=47 // pred_check_branch
          %270 = sbr.rel (%p268) target = $region52
        $region51: #{tpu_custom_call.1} parent=47 // pred_region
          %272 = dma.done %s264, 1024
        $region52: #{tpu_custom_call.1} parent=47 // pred_fallthru
          _
        %s273 = sand.u32 %s32, 1
        %s274 = scalar_lea.sflag [#allocation3], %s273
        %s275 = sand.u32 %s32, 1
        %s276 = smul.addr %s275, 64
        %s277 = scalar_lea.vmem [#allocation2], %s276
        %p278 = pneg %p45
        %p279 = pneg %p42
        %p280 = pneg %p66
        %p281 = pneg %p63
        %p282 = pneg %p87
        %p283 = pneg %p84
        %p284 = pneg %p108
        %p285 = pneg %p105
        %p286 = pneg %p129
        %p287 = pneg %p126
        %p288 = pneg %p150
        %p289 = pneg %p147
        %p290 = pneg %p171
        %p291 = pneg %p168
        %p292 = pneg %p197
        %p293 = pneg %p194
        %s294 = sand.u32 %s184, 1
        %s295 = scalar_lea.sflag [#allocation4], %s294
        %s296 = sand.u32 %s184, 1
        %s297 = smul.addr %s296, 64
        %s298 = scalar_lea.vmem [#allocation5], %s297
        %v299 = vld [vmem:[%s267] sm:$0xff]
        %v300 = vld [vmem:[%s267 + $0x8] sm:$0xff]
        %v301 = vld [vmem:[%s267 + $0x10] sm:$0xff]
        %v302 = vld [vmem:[%s267 + $0x18] sm:$0xff]
        %v303 = vld [vmem:[%s267 + $0x20] sm:$0xff]
        %v304 = vld [vmem:[%s267 + $0x28] sm:$0xff]
        %v305 = vld [vmem:[%s267 + $0x30] sm:$0xff]
        %v306 = vld [vmem:[%s267 + $0x38] sm:$0xff]
        %vm307 = vcmask 130048
        %v308 = vsel %vm307, %v299, 0.0
        %309 = vadd.xlane.f32.xlu0 %v308
        %v310 = vpop.xlane.xlu0 %309
        %v311 = vsel %vm307, %v300, 0.0
        %312 = vadd.xlane.f32.xlu0 %v311
        %v313 = vpop.xlane.xlu0 %312
        %v314 = vsel %vm307, %v301, 0.0
        %315 = vadd.xlane.f32.xlu0 %v314
        %v316 = vpop.xlane.xlu0 %315
        %v317 = vsel %vm307, %v302, 0.0
        %318 = vadd.xlane.f32.xlu0 %v317
        %v319 = vpop.xlane.xlu0 %318
        %v320 = vsel %vm307, %v303, 0.0
        %321 = vadd.xlane.f32.xlu0 %v320
        %v322 = vpop.xlane.xlu0 %321
        %v323 = vsel %vm307, %v304, 0.0
        %324 = vadd.xlane.f32.xlu0 %v323
        %v325 = vpop.xlane.xlu0 %324
        %v326 = vsel %vm307, %v305, 0.0
        %327 = vadd.xlane.f32.xlu0 %v326
        %v328 = vpop.xlane.xlu0 %327
        %v329 = vsel %vm307, %v306, 0.0
        %330 = vadd.xlane.f32.xlu0 %v329
        %v331 = vpop.xlane.xlu0 %330
        %v332 = vmul.f32 %v310, 0.0625
        %v333 = vmul.f32 %v313, 0.0625
        %v334 = vmul.f32 %v316, 0.0625
        %v335 = vmul.f32 %v319, 0.0625
        %v336 = vmul.f32 %v322, 0.0625
        %v337 = vmul.f32 %v325, 0.0625
        %v338 = vmul.f32 %v328, 0.0625
        %v339 = vmul.f32 %v331, 0.0625
        %v340 = vadd.f32 %v308, %v311
        %v341 = vrot.slane %v340, 4
        %v342 = vadd.f32 %v340, %v341
        %v343 = vrot.slane %v342, 2
        %v344 = vadd.f32 %v342, %v343
        %v345 = vrot.slane %v344, 1
        %v346 = vadd.f32 %v344, %v345
        %v347 = vadd.f32 %v314, %v317
        %v348 = vrot.slane %v347, 4
        %v349 = vadd.f32 %v347, %v348
        %v350 = vrot.slane %v349, 2
        %v351 = vadd.f32 %v349, %v350
        %v352 = vrot.slane %v351, 1
        %v353 = vadd.f32 %v351, %v352
        %v354 = vadd.f32 %v320, %v323
        %v355 = vrot.slane %v354, 4
        %v356 = vadd.f32 %v354, %v355
        %v357 = vrot.slane %v356, 2
        %v358 = vadd.f32 %v356, %v357
        %v359 = vrot.slane %v358, 1
        %v360 = vadd.f32 %v358, %v359
        %v361 = vadd.f32 %v326, %v329
        %v362 = vrot.slane %v361, 4
        %v363 = vadd.f32 %v361, %v362
        %v364 = vrot.slane %v363, 2
        %v365 = vadd.f32 %v363, %v364
        %v366 = vrot.slane %v365, 1
        %v367 = vadd.f32 %v365, %v366
        %v368 = vmul.f32 %v346, 0.0625
        %v369 = vmul.f32 %v353, 0.0625
        %v370 = vmul.f32 %v360, 0.0625
        %v371 = vmul.f32 %v367, 0.0625
        %v380 = vlaneseq
        %v381 = vand.u32 %v380, 127
        %v382 = vperm.slane %v332, %v381
        %v383 = vadd.s32 %v381, 4294967288
        %v384 = vperm.slane %v333, %v383
        %vm385 = vcmask 130112
        %v386 = vsel %vm385, %v384, %v382
        %v387 = vperm.slane %v334, %v381
        %v388 = vperm.slane %v335, %v383
        %v389 = vsel %vm385, %v388, %v387
        %v390 = vperm.slane %v336, %v381
        %v391 = vperm.slane %v337, %v383
        %v392 = vsel %vm385, %v391, %v390
        %v393 = vperm.slane %v338, %v381
        %v394 = vperm.slane %v339, %v383
        %v395 = vsel %vm385, %v394, %v393
        %vm396 = vcmask 1041409
        %v397 = vsel %vm396, %v389, %v386
        %vm398 = vcmask 1042434
        %v399 = vsel %vm398, %v392, %v397
        %vm400 = vcmask 1043459
        %v401 = vsel %vm400, %v395, %v399
        %v407 = vsel %vm396, %v369, %v368
        %v408 = vsel %vm398, %v370, %v407
        %v409 = vsel %vm400, %v371, %v408
        %410 = vrot.lane.b32.xlu0 %v409, 16
        %v411 = vpop.permute.xlu0 %410
        %v413 = vsel %vm307, %v401, %v411
        %v414 = vld [vmem:[%s1] sm:$0xff]
        %v415 = vld [vmem:[%s2] sm:$0xff]
        %417 = vset.pattern.permute.xlu0 0
        %418 = vperm.xlu0 %417, %v415
        %v419 = vpop.permute.xlu0 %418
        %vm421 = vcmask 31744
        %v423 = vsel %vm421, %v414, 0
        %vm425 = vcmask 1043456
        %v427 = vsel %vm425, %v413, 0
        %429 = vmatpush.msra.mxu0 0.0
        %430 = vmatpush.msra.mxu0 0.0
        %431 = vmatpush.msra.mxu0 0.0
        %432 = vmatpush.msra.mxu0 0.0
        %433 = vmatpush.msra.mxu0 0.0
        %434 = vmatpush.msra.mxu0 0.0
        %435 = vmatpush.msra.mxu0 0.0
        %436 = vmatpush.msra.mxu0 0.0
        %437 = vmatpush.msra.mxu0 0.0
        %438 = vmatpush.msra.mxu0 0.0
        %439 = vmatpush.msra.mxu0 0.0
        %440 = vmatpush.msra.mxu0 0.0
        %441 = vmatpush.msra.mxu0 0.0
        %442 = vmatpush.msra.mxu0 0.0
        %443 = vmatpush.msra.mxu0 0.0
        %444 = vmatpush.msra.mxu0 %v427
        %445 = vmatmul.f32.gmra.mxu0 %v423
        %v446 = vpop.f32.mrf.mxu0
        %v447 = vadd.f32 %v419, %v446
        %448 = vdwg.mxu0
        %v449 = vadd.f32 %v447, 3.0
        %v450 = vmax.f32 %v449, 0.0
        %v451 = vmin.f32 %v450, 6.0
        %v452 = vmul.f32 %v451, 0.16666667
        %v453 = vmul.f32 %v447, %v452
        %v454 = vld [vmem:[%s3] sm:$0xf]
        %v455 = vld [vmem:[%s4] sm:$0xf]
        %457 = vset.pattern.permute.xlu0 0
        %458 = vperm.xlu0 %457, %v455
        %v459 = vpop.permute.xlu0 %458
        %vm461 = vcmask 64512
        %v463 = vsel %vm461, %v454, 0
        %465 = vmatpush.msra.mxu0 0.0
        %466 = vmatpush.msra.mxu0 0.0
        %467 = vmatpush.msra.mxu0 0.0
        %468 = vmatpush.msra.mxu0 0.0
        %469 = vmatpush.msra.mxu0 0.0
        %470 = vmatpush.msra.mxu0 0.0
        %471 = vmatpush.msra.mxu0 0.0
        %472 = vmatpush.msra.mxu0 0.0
        %473 = vmatpush.msra.mxu0 0.0
        %474 = vmatpush.msra.mxu0 0.0
        %475 = vmatpush.msra.mxu0 0.0
        %476 = vmatpush.msra.mxu0 0.0
        %477 = vmatpush.msra.mxu0 0.0
        %478 = vmatpush.msra.mxu0 0.0
        %479 = vmatpush.msra.mxu0 0.0
        %480 = vmatpush.msra.mxu0 %v453
        %481 = vmatmul.f32.gmra.mxu0 %v463
        %v482 = vpop.f32.mrf.mxu0
        %v483 = vadd.f32 %v459, %v482
        %484 = vdwg.mxu0
        %v485 = vxor.u32 %v483, 2147483648
        %v486 = vmul.f32 %v485, 1.442695
        %v487 = vpow.pop %v486
        %v488 = vadd.f32 %v487, 1.0
        %v489 = vrcp.pop %v488
        %v490 = vmul.f32 %v488, %v489
        %v491 = vsub.f32 1.0, %v490
        %v492 = vmul.f32 %v489, %v491
        %v493 = vadd.f32 %v489, %v492
        %vm494 = vweird.f32 %v488
        %vm495 = vweird.f32 %v489
        %vm496 = vmor %vm494, %vm495
        %v497 = vsel %vm496, %v489, %v493
        %v498 = vand.u32 2147483647, %v488
        %vm499 = vcmp.eq.f32.partialorder %v498, 8.507059e+37
        %v500 = vand.u32 %v488, 2147483648
        %v501 = vor.u32 1.1754944e-38, %v500
        %v502 = vsel %vm499, %v501, %v497
        %v503 = vmul.f32 1.0, %v502
        %v504 = vld [vmem:[%s5] sm:$0xf]
        %v505 = vld [vmem:[%s6] sm:$0xf]
        %507 = vset.pattern.permute.xlu0 0
        %508 = vperm.xlu0 %507, %v505
        %v509 = vpop.permute.xlu0 %508
        %512 = vrot.lane.b32.xlu0 %v453, 112
        %v513 = vpop.permute.xlu0 %512
        %v516 = vsel %vm461, %v504, 0
        %518 = vmatpush.msra.mxu0 0.0
        %519 = vmatpush.msra.mxu0 0.0
        %520 = vmatpush.msra.mxu0 0.0
        %521 = vmatpush.msra.mxu0 0.0
        %522 = vmatpush.msra.mxu0 0.0
        %523 = vmatpush.msra.mxu0 0.0
        %524 = vmatpush.msra.mxu0 0.0
        %525 = vmatpush.msra.mxu0 0.0
        %526 = vmatpush.msra.mxu0 0.0
        %527 = vmatpush.msra.mxu0 0.0
        %528 = vmatpush.msra.mxu0 0.0
        %529 = vmatpush.msra.mxu0 0.0
        %530 = vmatpush.msra.mxu0 0.0
        %531 = vmatpush.msra.mxu0 0.0
        %532 = vmatpush.msra.mxu0 0.0
        %533 = vmatpush.msra.mxu0 %v513
        %534 = vmatmul.f32.gmra.mxu0 %v516
        %v535 = vpop.f32.mrf.mxu0
        %v536 = vadd.f32 %v509, %v535
        %537 = vdwg.mxu0
        %v538 = vxor.u32 %v536, 2147483648
        %v539 = vmul.f32 %v538, 1.442695
        %v540 = vpow.pop %v539
        %v541 = vadd.f32 %v540, 1.0
        %v542 = vrcp.pop %v541
        %v543 = vmul.f32 %v541, %v542
        %v544 = vsub.f32 1.0, %v543
        %v545 = vmul.f32 %v542, %v544
        %v546 = vadd.f32 %v542, %v545
        %vm547 = vweird.f32 %v541
        %vm548 = vweird.f32 %v542
        %vm549 = vmor %vm547, %vm548
        %v550 = vsel %vm549, %v542, %v546
        %v551 = vand.u32 2147483647, %v541
        %vm552 = vcmp.eq.f32.partialorder %v551, 8.507059e+37
        %v553 = vand.u32 %v541, 2147483648
        %v554 = vor.u32 1.1754944e-38, %v553
        %v555 = vsel %vm552, %v554, %v550
        %v556 = vmul.f32 1.0, %v555
        %v558 = vrot.slane %v556, 1
        %v559 = vrot.slane %v556, 2
        %v560 = vrot.slane %v556, 3
        %v561 = vperm.slane %v556, 0
        %v562 = vperm.slane %v558, 0
        %v563 = vperm.slane %v559, 0
        %v564 = vperm.slane %v560, 0
        %v569 = vmul.f32 %v299, %v561
        %v570 = vmul.f32 %v300, %v561
        %v571 = vmul.f32 %v301, %v562
        %v572 = vmul.f32 %v302, %v562
        %v573 = vmul.f32 %v303, %v563
        %v574 = vmul.f32 %v304, %v563
        %v575 = vmul.f32 %v305, %v564
        %v576 = vmul.f32 %v306, %v564
        %v577 = vperm.slane %v503, 0
        %v578 = vlaneseq
        %v579 = vshrl.u32 %v578, 7
        %581 = vset.pattern.permute.xlu0 %v579
        %582 = vperm.xlu0 %581, %v577
        %v583 = vpop.permute.xlu0 %582
        %v584 = vlaneseq
        %v585 = vshrl.u32 %v584, 7
        %v586 = vadd.s32 %v585, 8
        %587 = vset.pattern.permute.xlu0 %v586
        %588 = vperm.xlu0 %587, %v577
        %v589 = vpop.permute.xlu0 %588
        %v590 = vperm.slane %v503, 1
        %v591 = vlaneseq
        %v592 = vshrl.u32 %v591, 7
        %594 = vset.pattern.permute.xlu0 %v592
        %595 = vperm.xlu0 %594, %v590
        %v596 = vpop.permute.xlu0 %595
        %v597 = vlaneseq
        %v598 = vshrl.u32 %v597, 7
        %v599 = vadd.s32 %v598, 8
        %600 = vset.pattern.permute.xlu0 %v599
        %601 = vperm.xlu0 %600, %v590
        %v602 = vpop.permute.xlu0 %601
        %v603 = vperm.slane %v503, 2
        %v604 = vlaneseq
        %v605 = vshrl.u32 %v604, 7
        %607 = vset.pattern.permute.xlu0 %v605
        %608 = vperm.xlu0 %607, %v603
        %v609 = vpop.permute.xlu0 %608
        %v610 = vlaneseq
        %v611 = vshrl.u32 %v610, 7
        %v612 = vadd.s32 %v611, 8
        %613 = vset.pattern.permute.xlu0 %v612
        %614 = vperm.xlu0 %613, %v603
        %v615 = vpop.permute.xlu0 %614
        %v616 = vperm.slane %v503, 3
        %v617 = vlaneseq
        %v618 = vshrl.u32 %v617, 7
        %620 = vset.pattern.permute.xlu0 %v618
        %621 = vperm.xlu0 %620, %v616
        %v622 = vpop.permute.xlu0 %621
        %v623 = vlaneseq
        %v624 = vshrl.u32 %v623, 7
        %v625 = vadd.s32 %v624, 8
        %626 = vset.pattern.permute.xlu0 %v625
        %627 = vperm.xlu0 %626, %v616
        %v628 = vpop.permute.xlu0 %627
        %v629 = vmul.f32 %v569, %v583
        %v630 = vmul.f32 %v570, %v589
        %v631 = vmul.f32 %v571, %v596
        %v632 = vmul.f32 %v572, %v602
        %v633 = vmul.f32 %v573, %v609
        %v634 = vmul.f32 %v574, %v615
        %v635 = vmul.f32 %v575, %v622
        %v636 = vmul.f32 %v576, %v628
        %637 = vst.msk [vmem:[%s298] sm:$0xff] %vm307, %v629
        %638 = vst.msk [vmem:[%s298 + $0x8] sm:$0xff] %vm307, %v630
        %639 = vst.msk [vmem:[%s298 + $0x10] sm:$0xff] %vm307, %v631
        %640 = vst.msk [vmem:[%s298 + $0x18] sm:$0xff] %vm307, %v632
        %641 = vst.msk [vmem:[%s298 + $0x20] sm:$0xff] %vm307, %v633
        %642 = vst.msk [vmem:[%s298 + $0x28] sm:$0xff] %vm307, %v634
        %643 = vst.msk [vmem:[%s298 + $0x30] sm:$0xff] %vm307, %v635
        %644 = vst.msk [vmem:[%s298 + $0x38] sm:$0xff] %vm307, %v636
        %s645 = sand.u32 %s184, 1
        %s646 = scalar_lea.sflag [#allocation4], %s645
        %s647 = sand.u32 %s184, 1
        %s648 = smul.addr %s647, 64
        %s649 = scalar_lea.vmem [#allocation5], %s648
        // Predicated region
        $region53: #{tpu_custom_call.1} parent=47 // pred_check
          %p650 = pneg %p194
        $region54: #{tpu_custom_call.1} parent=47 // pred_check_branch
          %652 = sbr.rel (%p650) target = $region56
        $region55: #{tpu_custom_call.1} parent=47 // pred_region
          %654 = vsyncadd %s646, 0
          %s655 = smul.addr %s24, 8
          %s656 = smul.addr %s655, 8
          %s657 = scalar_lea.hbm %s7, %s656
          %s658 = sshll.u32 %s649, 4
          %s659 = int_to_ptr.vmem [resolvable:$true] %s658
          %s660 = sshll.u32 %s657, 4
          %s661 = int_to_ptr.hbm [resolvable:$true] %s660
          %666 = dma.vmem_to_hbm [thread:$0]  %s659, 1024, %s661, %s646, 128, 128, 8
        $region56: #{tpu_custom_call.1} parent=47 // pred_fallthru
          _
      $region48: #{tpu_custom_call.1} parent=5 // pred_fallthru
        _
      %p667 = scmp.le.s32.totalorder 2, %s19
      // Predicated region
      $region57: #{tpu_custom_call.1} parent=5 // pred_check
        %p668 = pneg %p667
      $region58: #{tpu_custom_call.1} parent=5 // pred_check_branch
        %670 = sbr.rel (%p668) target = $region60
      $region59: #{tpu_custom_call.1} parent=5 // pred_region
        %s671 = ssub.s32 %s19, 2
        // Predicated region
        $region61: #{tpu_custom_call.1} parent=59 // pred_check
          %p672 = pneg %p200
        $region62: #{tpu_custom_call.1} parent=59 // pred_check_branch
          %674 = sbr.rel (%p672) target = $region64
        $region63: #{tpu_custom_call.1} parent=59 // pred_region
          %s675 = sand.u32 %s185, 1
          %s676 = scalar_lea.sflag [#allocation4], %s675
          %s677 = sand.u32 %s185, 1
          %s678 = smul.addr %s677, 64
          %s679 = scalar_lea.vmem [#allocation5], %s678
          %681 = dma.done %s676, 1024
        $region64: #{tpu_custom_call.1} parent=59 // pred_fallthru
          _
      $region60: #{tpu_custom_call.1} parent=5 // pred_fallthru
        _
    $region6: #{tpu_custom_call.1} parent=1 // loop_footer
      %s23 = sadd.s32 1, %s19
    $region7: #{tpu_custom_call.1} parent=1 // loop_footer_branch
      %18 = sbr.rel target = $region3
    $region8: #{tpu_custom_call.1} parent=1 // loop_exit
      _
    %682 = vsyncpa [#allocation3], 1
    %s683 = scalar_lea.sflag [#allocation3], 1
    %684 = vsyncpa %s683, 1
    %685 = vsyncpa [#allocation4], 1
    %s686 = scalar_lea.sflag [#allocation4], 1
    %687 = vsyncpa %s686, 1

</llo_original>
